<compile_context>
chip_gen: v7x
topology: tpu7x:2x2x1
jax: 0.10.0
libtpu: 0.0.40
codegen_flags: <defaults>
</compile_context>

<pallas_src>
import jax
import jax.numpy as jnp
import numpy as np
from jax.experimental import pallas as pl
from jax.experimental.pallas import tpu as pltpu

EPSILON = 1e-4
_MIB = 1024 * 1024
_LANE_CANDIDATES = (1024, 512, 256, 128)


def _cdiv(a, b):
    return -(-a // b)


def _round_up(a, b):
    return _cdiv(a, b) * b


def _make_kernel(n):
    def kernel(w_ref, *refs):
        # w_ref : SMEM (n,) f32 normalized weights (scalar prefetch).
        # refs  : n input VMEM tiles (tr, lane) + 1 output VMEM tile (tr, lane).
        o_ref = refs[n]
        acc = w_ref[0] * refs[0][...].astype(jnp.float32)
        for i in range(1, n):
            acc = acc + w_ref[i] * refs[i][...].astype(jnp.float32)
        o_ref[...] = acc.astype(o_ref.dtype)

    return kernel


def _tpu_vmem_and_cores():
    """(per-core VMEM bytes, #TensorCores).  Conservative fallbacks."""
    try:
        info = pltpu.get_tpu_info()
        vmem_cap = int(info.vmem_capacity_bytes)
    except Exception:
        info, vmem_cap = None, 64 * _MIB  # conservative (v7x per-TC size)
    num_tc = None
    if info is not None:
        for attr in ("num_cores", "core_count", "num_tensorcores"):
            v = getattr(info, attr, None)
            if isinstance(v, int) and v > 0:
                num_tc = v
                break
    if num_tc is None:
        # 64 MiB per-core VMEM is the v7x signature (2 TCs); 128 MiB -> 1 TC.
        num_tc = 2 if vmem_cap <= 64 * _MIB else 1
    return vmem_cap, num_tc


def _weighted_sum_2d(x2ds, w, dtype, itemsize):
    """Run the Pallas kernel over lane-dense (rows, lane) views."""
    n = len(x2ds)
    rows, lane = x2ds[0].shape
    sub = max(8, 32 // itemsize)  # sublane multiple (f32:8, bf16:16, i8:32)

    vmem_cap, num_tc = _tpu_vmem_and_cores()
    # Working-set budget: double-buffered (n inputs + 1 output) blocks in the
    # input dtype plus ~2 f32 temporaries (upcast + accumulator) per block.
    budget = min(vmem_cap // 2, 48 * _MIB if vmem_cap >= 96 * _MIB else 24 * _MIB)
    per_row_bytes = lane * (2 * (n + 1) * itemsize + 2 * 4)
    tr_budget = max(sub, (budget // per_row_bytes) // sub * sub)

    # Size-/core-count-gated split: 1 step for small inputs, >=2 blocks per
    # TensorCore for large ones, never shrinking a block below ~1 MiB.
    per_input_bytes = rows * lane * itemsize
    target_steps = max(1, min(2 * num_tc, per_input_bytes // _MIB))

    if rows <= tr_budget and target_steps == 1:
        tr = rows  # single block == full dim (exempt from the sublane rule)
    else:
        steps = max(target_steps, _cdiv(rows, tr_budget))
        tr = min(tr_budget, _round_up(_cdiv(rows, steps), sub))
    grid = (_cdiv(rows, tr),)

    needed = tr * per_row_bytes
    vmem_limit = int(min(vmem_cap, max(needed + 4 * _MIB, 32 * _MIB)))

    block = pl.BlockSpec((tr, lane), lambda r, w_pref: (r, 0))
    return pl.pallas_call(
        _make_kernel(n),
        out_shape=jax.ShapeDtypeStruct((rows, lane), dtype),
        grid_spec=pltpu.PrefetchScalarGridSpec(
            num_scalar_prefetch=1,
            grid=grid,
            in_specs=[block] * n,
            out_specs=block,
        ),
        compiler_params=pltpu.CompilerParams(
            dimension_semantics=("parallel",),
            vmem_limit_bytes=vmem_limit,
        ),
    )(w, *x2ds)


def weighted_sum(xs, weights, *, epsilon=EPSILON):
    """Pallas implementation of WeightedSum.forward (act=None => Identity)."""
    n = len(xs)
    if n == 0:
        raise ValueError("Need at least one input.")
    if weights.shape != (n,):
        raise ValueError("Invalid input size not equal to weight size.")

    shape = xs[0].shape
    dtype = xs[0].dtype
    for x in xs:
        if x.shape != shape or x.dtype != dtype:
            raise ValueError("All inputs must share shape and dtype.")

    # --- weight ReLU + normalization: n scalars, hoisted out of the kernel ---
    w = jnp.maximum(weights.astype(jnp.float32), 0.0)
    w = w / (jnp.sum(w) + jnp.float32(epsilon))

    total = int(np.prod(shape)) if shape else 1
    if total == 0:
        return jnp.zeros(shape, dtype)
    itemsize = int(jnp.dtype(dtype).itemsize)

    # --- lane-dense flat view: widest lane (multiple of 128) dividing total ---
    lane = next((c for c in _LANE_CANDIDATES if total % c == 0), None)
    if lane is None:
        # Ragged: main (128-aligned prefix, through the kernel) + tail (<128
        # elements, trivial XLA).  No padded copies of inputs or output.
        lane = 128
    main = (total // lane) * lane
    tail = total - main
    rows = main // lane

    flats = [x.reshape(-1) for x in xs]  # contiguous reshape: no data movement

    def _xla_mix(parts):
        acc = w[0] * parts[0].astype(jnp.float32)
        for i in range(1, n):
            acc = acc + w[i] * parts[i].astype(jnp.float32)
        return acc.astype(dtype)

    if rows == 0:  # fewer than 128 elements: not worth a kernel launch
        return _xla_mix(flats).reshape(shape)

    mains = flats if tail == 0 else [f[:main] for f in flats]
    x2ds = [m.reshape(rows, lane) for m in mains]
    out2d = _weighted_sum_2d(x2ds, w, dtype, itemsize)

    if tail == 0:
        return out2d.reshape(shape)
    out_tail = _xla_mix([f[main:] for f in flats])
    return jnp.concatenate([out2d.reshape(-1), out_tail]).reshape(shape)


def weighted_sum_ref(xs, weights, *, epsilon=EPSILON):
    w = jnp.maximum(weights.astype(jnp.float32), 0.0)
    w = w / (jnp.sum(w) + epsilon)
    return jnp.einsum("i,i...->...", w, jnp.stack(xs, axis=0)).astype(xs[0].dtype)


if __name__ == "__main__":
    input_size = 3
    # Deterministic parameter init, same as nn.Parameter(torch.ones(input_size)).
    weights = jnp.ones((input_size,), dtype=jnp.float32)

    key = jax.random.PRNGKey(0)

    def make_inputs(shape, dtype=jnp.float32):
        keys = jax.random.split(key, input_size)
        return [jax.random.normal(k, shape, dtype=dtype) for k in keys]

    # Primary case: small NCHW feature maps (batch=2, channels=4, spatial=16x16)
    # -> single grid step (size-gated policy).
    xs = make_inputs((2, 4, 16, 16))
    out = jax.block_until_ready(weighted_sum(xs, weights))
    ref = weighted_sum_ref(xs, weights)
    np.testing.assert_allclose(np.asarray(out), np.asarray(ref), rtol=1e-5, atol=1e-5)
    assert out.shape == xs[0].shape and out.dtype == xs[0].dtype

    # Larger feature map (~2 MiB per input): exercises the multi-block grid.
    xs2 = make_inputs((4, 8, 128, 128))
    out2 = jax.block_until_ready(weighted_sum(xs2, weights))
    ref2 = weighted_sum_ref(xs2, weights)
    np.testing.assert_allclose(np.asarray(out2), np.asarray(ref2), rtol=1e-5, atol=1e-5)

    # Awkward size (not a multiple of 128): exercises the main+tail split.
    xs3 = make_inputs((2, 3, 5, 7))
    out3 = jax.block_until_ready(weighted_sum(xs3, weights))
    ref3 = weighted_sum_ref(xs3, weights)
    np.testing.assert_allclose(np.asarray(out3), np.asarray(ref3), rtol=1e-5, atol=1e-5)

    print("KERNEL_OK")
</pallas_src>

<mosaic_0001>
module attributes {stable_mosaic.version = 11 : i64} {
  func.func @kernel(%arg0: i32, %arg1: memref<3xf32, #tpu.memory_space<smem>>, %arg2: memref<2x1024xf32, #tpu.memory_space<vmem>>, %arg3: memref<2x1024xf32, #tpu.memory_space<vmem>>, %arg4: memref<2x1024xf32, #tpu.memory_space<vmem>>, %arg5: memref<2x1024xf32, #tpu.memory_space<vmem>>) attributes {dimension_semantics = [#tpu.dimension_semantics<parallel>], iteration_bounds = array<i64: 1>, scalar_prefetch = 1 : i64, scratch_operands = 0 : i64, tpu.core_type = #tpu.core_type<tc>, window_params = [{transform_indices = @transform_0, window_bounds = array<i64: 2, 1024>}, {transform_indices = @transform_1, window_bounds = array<i64: 2, 1024>}, {transform_indices = @transform_2, window_bounds = array<i64: 2, 1024>}, {transform_indices = @transform_3, window_bounds = array<i64: 2, 1024>}]} {
    %c0 = arith.constant 0 : index
    %0 = memref.load %arg1[%c0] : memref<3xf32, #tpu.memory_space<smem>>
    %c0_0 = arith.constant 0 : index
    %c0_1 = arith.constant 0 : index
    %1 = vector.load %arg2[%c0_0, %c0_1] : memref<2x1024xf32, #tpu.memory_space<vmem>>, vector<2x1024xf32>
    %2 = vector.broadcast %0 : f32 to vector<2x1024xf32>
    %3 = arith.mulf %2, %1 : vector<2x1024xf32>
    %c1 = arith.constant 1 : index
    %4 = memref.load %arg1[%c1] : memref<3xf32, #tpu.memory_space<smem>>
    %c0_2 = arith.constant 0 : index
    %c0_3 = arith.constant 0 : index
    %5 = vector.load %arg3[%c0_2, %c0_3] : memref<2x1024xf32, #tpu.memory_space<vmem>>, vector<2x1024xf32>
    %6 = vector.broadcast %4 : f32 to vector<2x1024xf32>
    %7 = arith.mulf %6, %5 : vector<2x1024xf32>
    %8 = arith.addf %3, %7 : vector<2x1024xf32>
    %c2 = arith.constant 2 : index
    %9 = memref.load %arg1[%c2] : memref<3xf32, #tpu.memory_space<smem>>
    %c0_4 = arith.constant 0 : index
    %c0_5 = arith.constant 0 : index
    %10 = vector.load %arg4[%c0_4, %c0_5] : memref<2x1024xf32, #tpu.memory_space<vmem>>, vector<2x1024xf32>
    %11 = vector.broadcast %9 : f32 to vector<2x1024xf32>
    %12 = arith.mulf %11, %10 : vector<2x1024xf32>
    %13 = arith.addf %8, %12 : vector<2x1024xf32>
    %c0_6 = arith.constant 0 : index
    %c0_7 = arith.constant 0 : index
    %14 = vector.load %arg5[%c0_6, %c0_7] : memref<2x1024xf32, #tpu.memory_space<vmem>>, vector<2x1024xf32>
    tpu.vector_store %arg5[%c0_6, %c0_7], %13 {strides = array<i32>} : memref<2x1024xf32, #tpu.memory_space<vmem>>, vector<2x1024xf32>,
    return
  }
  func.func @transform_0(%arg0: i32, %arg1: memref<3xf32, #tpu.memory_space<smem>>) -> (i32, i32) {
    %c0_i32 = arith.constant 0 : i32
    %c0_i32_0 = arith.constant 0 : i32
    return %arg0, %c0_i32 : i32, i32
  }
  func.func @transform_1(%arg0: i32, %arg1: memref<3xf32, #tpu.memory_space<smem>>) -> (i32, i32) {
    %c0_i32 = arith.constant 0 : i32
    %c0_i32_0 = arith.constant 0 : i32
    return %arg0, %c0_i32 : i32, i32
  }
  func.func @transform_2(%arg0: i32, %arg1: memref<3xf32, #tpu.memory_space<smem>>) -> (i32, i32) {
    %c0_i32 = arith.constant 0 : i32
    %c0_i32_0 = arith.constant 0 : i32
    return %arg0, %c0_i32 : i32, i32
  }
  func.func @transform_3(%arg0: i32, %arg1: memref<3xf32, #tpu.memory_space<smem>>) -> (i32, i32) {
    %c0_i32 = arith.constant 0 : i32
    %c0_i32_0 = arith.constant 0 : i32
    return %arg0, %c0_i32 : i32, i32
  }
}

</mosaic_0001>

<llo_original>
// kernel: tpu_custom_call.1
$region0: #{tpu_custom_call.1}
  #allocation0 [shape = 'u32[]', space=smem, size = 0x4, offset = 0x4, fixed_abs, tag = 'smem constant byte address 0x4 - core index']
  #allocation1 [shape = 'u32[144,128]{1,0:T(1,128)}', space=vmem, size = 0x12000, scoped, tag = 'internal scratch']
  #allocation2 [shape = 's32[1]{0}', space=sflag, size = 0x4, scoped, tag = 'scoped memory for tpu_custom_call.1']
  #allocation3 [shape = 'u8[512]{0}', space=smem, size = 0x200, scoped, tag = 'prefetched SMEM operand 0']
  %s0 = inlined_call_operand.hbm [shape: f32[3], index: 0, kind: input, shape index: {}]
  %s1 = inlined_call_operand.hbm [shape: f32[2,1024], index: 1, kind: input, shape index: {}]
  %s2 = inlined_call_operand.hbm [shape: f32[2,1024], index: 2, kind: input, shape index: {}]
  %s3 = inlined_call_operand.hbm [shape: f32[2,1024], index: 3, kind: input, shape index: {}]
  %s4 = inlined_call_operand.hbm [shape: f32[2,1024], index: 4, kind: output, shape index: {}]
  %s5 = sld [smem:[#allocation0]]
  $region34: #{tpu_custom_call.1} parent=0
    _
  %s7 = ssub.s32 1, %s5
  %s8 = scalar_select 0, %s7, %s5
  %10 = dma.hbm_to_smem %s0, 16, [#allocation3], [#allocation2]
  %11 = dma.done [#allocation2], 16
  %12 = sfence
  $region1: #{tpu_custom_call.1} parent=0
    #allocation4 [shape = 'u8[8192]{0}', space=vmem, size = 0x2000, scoped, tag = 'input window, operand 1, single buffered']
    #allocation5 [shape = 's32[1]{0}', space=sflag, size = 0x4, scoped, tag = 'scoped memory for tpu_custom_call.1']
    #allocation6 [shape = 's32[1]{0}', space=sflag, size = 0x4, scoped, tag = 'scoped memory for tpu_custom_call.1']
    #allocation7 [shape = 'u8[8192]{0}', space=vmem, size = 0x2000, scoped, tag = 'input window, operand 2, single buffered']
    #allocation8 [shape = 's32[1]{0}', space=sflag, size = 0x4, scoped, tag = 'scoped memory for tpu_custom_call.1']
    #allocation9 [shape = 'u8[8192]{0}', space=vmem, size = 0x2000, scoped, tag = 'input window, operand 3, single buffered']
    #allocation10 [shape = 'u8[8192]{0}', space=vmem, size = 0x2000, scoped, tag = 'output window, operand 0, single buffered']
    %13 = vsyncpa [#allocation5], 0
    %14 = vsyncpa [#allocation8], 0
    %15 = vsyncpa [#allocation6], 0
    // Predicated region
    $region2: #{tpu_custom_call.1} parent=1 // pred_check
      _
    $region3: #{tpu_custom_call.1} parent=1 // pred_check_branch
      %17 = sbr.rel (0) target = $region5
    $region4: #{tpu_custom_call.1} parent=1 // pred_region
      %s19 = ssub.s32 256, 256
      %20 = vsyncadd [#allocation5], %s19
      %s22 = sshll.u32 [#allocation4], 4
      %s23 = int_to_ptr.vmem [resolvable:$true] %s22
      %25 = dma.hbm_to_vmem [thread:$0]  %s1, 256, %s23, [#allocation5]
    $region5: #{tpu_custom_call.1} parent=1 // pred_fallthru
      _
    // Predicated region
    $region6: #{tpu_custom_call.1} parent=1 // pred_check
      _
    $region7: #{tpu_custom_call.1} parent=1 // pred_check_branch
      %27 = sbr.rel (0) target = $region9
    $region8: #{tpu_custom_call.1} parent=1 // pred_region
      %s29 = ssub.s32 256, 256
      %30 = vsyncadd [#allocation8], %s29
      %s32 = sshll.u32 [#allocation7], 4
      %s33 = int_to_ptr.vmem [resolvable:$true] %s32
      %35 = dma.hbm_to_vmem [thread:$0]  %s2, 256, %s33, [#allocation8]
    $region9: #{tpu_custom_call.1} parent=1 // pred_fallthru
      _
    // Predicated region
    $region10: #{tpu_custom_call.1} parent=1 // pred_check
      _
    $region11: #{tpu_custom_call.1} parent=1 // pred_check_branch
      %37 = sbr.rel (0) target = $region13
    $region12: #{tpu_custom_call.1} parent=1 // pred_region
      %s39 = ssub.s32 256, 256
      %40 = vsyncadd [#allocation8], %s39
      %s42 = sshll.u32 [#allocation9], 4
      %s43 = int_to_ptr.vmem [resolvable:$true] %s42
      %45 = dma.hbm_to_vmem [thread:$0]  %s3, 256, %s43, [#allocation8]
    $region13: #{tpu_custom_call.1} parent=1 // pred_fallthru
      _
    // Predicated region
    $region14: #{tpu_custom_call.1} parent=1 // pred_check
      _
    $region15: #{tpu_custom_call.1} parent=1 // pred_check_branch
      %47 = sbr.rel (0) target = $region17
    $region16: #{tpu_custom_call.1} parent=1 // pred_region
      %48 = dma.done [#allocation5], 256
    $region17: #{tpu_custom_call.1} parent=1 // pred_fallthru
      _
    // Predicated region
    $region18: #{tpu_custom_call.1} parent=1 // pred_check
      _
    $region19: #{tpu_custom_call.1} parent=1 // pred_check_branch
      %50 = sbr.rel (0) target = $region21
    $region20: #{tpu_custom_call.1} parent=1 // pred_region
      %51 = dma.done [#allocation8], 256
    $region21: #{tpu_custom_call.1} parent=1 // pred_fallthru
      _
    // Predicated region
    $region22: #{tpu_custom_call.1} parent=1 // pred_check
      _
    $region23: #{tpu_custom_call.1} parent=1 // pred_check_branch
      %53 = sbr.rel (0) target = $region25
    $region24: #{tpu_custom_call.1} parent=1 // pred_region
      %54 = dma.done [#allocation8], 256
    $region25: #{tpu_custom_call.1} parent=1 // pred_fallthru
      _
    %s55 = sld [smem:[#allocation3]]
    %v56 = vld [vmem:[#allocation4] sm:$0xff]
    %v57 = vld [vmem:[#allocation4 + $0x8] sm:$0xff]
    %v58 = vstv %s55
    %v59 = vmul.f32 %v58, %v56
    %v60 = vmul.f32 %v58, %v57
    %s61 = sld [smem:[#allocation3 + $0x1]]
    %v62 = vld [vmem:[#allocation7] sm:$0xff]
    %v63 = vld [vmem:[#allocation7 + $0x8] sm:$0xff]
    %v64 = vstv %s61
    %v65 = vmul.f32 %v64, %v62
    %v66 = vmul.f32 %v64, %v63
    %v67 = vadd.f32 %v59, %v65
    %v68 = vadd.f32 %v60, %v66
    %s69 = sld [smem:[#allocation3 + $0x2]]
    %v70 = vld [vmem:[#allocation9] sm:$0xff]
    %v71 = vld [vmem:[#allocation9 + $0x8] sm:$0xff]
    %v72 = vstv %s69
    %v73 = vmul.f32 %v72, %v70
    %v74 = vmul.f32 %v72, %v71
    %v75 = vadd.f32 %v67, %v73
    %v76 = vadd.f32 %v68, %v74
    %77 = vst [vmem:[#allocation10] sm:$0xff] %v75
    %78 = vst [vmem:[#allocation10 + $0x8] sm:$0xff] %v76
    // Predicated region
    $region26: #{tpu_custom_call.1} parent=1 // pred_check
      _
    $region27: #{tpu_custom_call.1} parent=1 // pred_check_branch
      %80 = sbr.rel (0) target = $region29
    $region28: #{tpu_custom_call.1} parent=1 // pred_region
      %s82 = ssub.s32 256, 256
      %83 = vsyncadd [#allocation6], %s82
      %s85 = sshll.u32 [#allocation10], 4
      %s86 = int_to_ptr.vmem [resolvable:$true] %s85
      %88 = dma.vmem_to_hbm [thread:$0]  %s86, 256, %s4, [#allocation6]
    $region29: #{tpu_custom_call.1} parent=1 // pred_fallthru
      _
    // Predicated region
    $region30: #{tpu_custom_call.1} parent=1 // pred_check
      _
    $region31: #{tpu_custom_call.1} parent=1 // pred_check_branch
      %90 = sbr.rel (0) target = $region33
    $region32: #{tpu_custom_call.1} parent=1 // pred_region
      %91 = dma.done [#allocation6], 256
    $region33: #{tpu_custom_call.1} parent=1 // pred_fallthru
      _
    %92 = vsyncpa [#allocation5], 1
    %93 = vsyncpa [#allocation8], 1
    %94 = vsyncpa [#allocation6], 1

</llo_original>
